<compile_context>
chip_gen: v7x
topology: tpu7x:2x2x1
jax: 0.10.0
libtpu: 0.0.40
codegen_flags: <defaults>
</compile_context>

<pallas_src>
import functools

import jax
import jax.numpy as jnp
from jax.experimental import pallas as pl
from jax.experimental.pallas import tpu as pltpu


def _round_up(n, m):
    return ((n + m - 1) // m) * m


def _rnn_recurrence_kernel(xp_ref, w_hh_hbm_ref, hs_ref,
                           h_scratch, w_scratch, dma_sem,
                           *, t_chunk, preload_weight, unroll, matmul_dtype):
    """One grid step == t_chunk sequential timesteps of the recurrence.

    Grid = (batch_blocks, num_time_chunks); batch axis "parallel", time "arbitrary".

    xp_ref:       (t_chunk, B_TILE, H_pad)  precomputed x_t @ W_ih^T + b_ih + b_hh
    w_hh_hbm_ref: (H_pad, H_pad)            W_hh^T left in HBM (memory_space=pl.ANY)
    hs_ref:       (t_chunk, B_TILE, H_pad)  hidden states h_t (lane-dense output)
    h_scratch:    (B_TILE, H_pad)           hidden state carried across time chunks
    w_scratch:    (H_pad, H_pad)            single-buffered resident copy of W_hh^T
    """
    @pl.when(pl.program_id(1) == 0)
    def _():
        # Start of this batch block's time sweep: reset h, fetch the weight ONCE.
        h_scratch[...] = jnp.zeros_like(h_scratch)
        cp = pltpu.make_async_copy(w_hh_hbm_ref, w_scratch, dma_sem)
        cp.start()
        cp.wait()

    if preload_weight:
        # Small weight (H_pad <= 128 -> <= 16 f32 vregs): hold in vregs all chunk.
        w_hh_t = w_scratch[...]
        if matmul_dtype != jnp.float32:
            w_hh_t = w_hh_t.astype(matmul_dtype)

    def step(t, h):
        if preload_weight:
            w = w_hh_t
        else:
            # Large weight: re-load from VMEM each step so it is not pinned in
            # vregs across iterations (avoids register-spill storm).
            w = w_scratch[...]
            if matmul_dtype != jnp.float32:
                w = w.astype(matmul_dtype)
        lhs = h if matmul_dtype == jnp.float32 else h.astype(matmul_dtype)
        pre = xp_ref[t] + jnp.dot(lhs, w, preferred_element_type=jnp.float32)
        h_new = jnp.tanh(pre)
        hs_ref[t] = h_new.astype(hs_ref.dtype)
        return h_new

    # TODO(synk): for very small B_TILE, explicit pltpu.matmul_push_rhs/acc_lhs to
    # latch W_hh^T in the MXU across the chunk could further cut per-step latency.
    h_last = jax.lax.fori_loop(0, t_chunk, step, h_scratch[...], unroll=unroll)
    h_scratch[...] = h_last


def rnn_vanilla_forward(x, params, *, matmul_dtype=jnp.float32,
                        pipeline_vmem_budget=16 * 1024 * 1024):
    """x: (B, input_size, T) float32 -> (B, output_size, T) float32."""
    w_ih, w_hh, b_ih, b_hh, w_lin, b_lin = (
        params["w_ih"], params["w_hh"], params["b_ih"],
        params["b_hh"], params["w_lin"], params["b_lin"])

    f32 = jnp.float32
    B, I, T = x.shape
    H = w_ih.shape[0]
    O = w_lin.shape[0]

    B_pad = _round_up(B, 8)      # sublane multiple
    H_pad = _round_up(H, 128)    # lane multiple

    # ---- optional batch-block parallel axis (uses 2nd TensorCore when present) ----
    try:
        num_cores = int(getattr(jax.devices()[0], "num_cores", 1) or 1)
    except Exception:  # pragma: no cover - defensive, any failure -> single block
        num_cores = 1
    batch_blocks = 2 if (num_cores >= 2 and B_pad % 16 == 0) else 1
    B_TILE = B_pad // batch_blocks

    # ---- t_chunk from a VMEM budget; chunking chosen to minimize padded tail ----
    bytes_per_timestep = 2 * 2 * B_TILE * H_pad * 4   # (xp in + hs out) x double-buffer
    t_budget = max(1, pipeline_vmem_budget // bytes_per_timestep)
    t_cap = int(max(1, min(T, 256, t_budget)))
    num_chunks = -(-T // t_cap)                       # cdiv
    t_chunk = -(-T // num_chunks)                     # cdiv -> tail waste < num_chunks
    T_pad = t_chunk * num_chunks

    # ---- hoisted input projection, built directly in padded layout ----
    x_tm = jnp.transpose(x, (2, 0, 1)).astype(f32)                       # (T, B, I)
    if B_pad != B:
        x_tm = jnp.pad(x_tm, ((0, 0), (0, B_pad - B), (0, 0)))
    w_ih_p = jnp.pad(w_ih.astype(f32), ((0, H_pad - H), (0, 0)))         # (H_pad, I)
    bias_p = jnp.pad((b_ih + b_hh).astype(f32), (0, H_pad - H))          # (H_pad,)
    x_proj = x_tm @ w_ih_p.T + bias_p                                    # (T, B_pad, H_pad)
    if T_pad != T:
        x_proj = jnp.pad(x_proj, ((0, T_pad - T), (0, 0), (0, 0)))

    w_hh_t_p = jnp.pad(w_hh.T.astype(f32),
                       ((0, H_pad - H), (0, H_pad - H)))                 # (H_pad, H_pad)

    # ---- VMEM accounting -> explicit limit ----
    pipelined_bytes = 2 * 2 * t_chunk * B_TILE * H_pad * 4   # xp + hs, double-buffered
    resident_bytes = H_pad * H_pad * 4 + B_TILE * H_pad * 4  # w_scratch + h_scratch
    vmem_limit = int(min(64 * 1024 * 1024,
                         max(32 * 1024 * 1024,
                             int(1.5 * (pipelined_bytes + resident_bytes)) + (1 << 20))))

    preload_weight = H_pad <= 128
    unroll = True if t_chunk <= 32 else 8

    kernel = functools.partial(
        _rnn_recurrence_kernel, t_chunk=t_chunk, preload_weight=preload_weight,
        unroll=unroll, matmul_dtype=matmul_dtype)

    # ---- Pallas kernel: only the sequential recurrence, emitting hidden states ----
    hs = pl.pallas_call(
        kernel,
        out_shape=jax.ShapeDtypeStruct((T_pad, B_pad, H_pad), f32),
        grid_spec=pltpu.PrefetchScalarGridSpec(
            num_scalar_prefetch=0,
            grid=(batch_blocks, num_chunks),
            in_specs=[
                pl.BlockSpec((t_chunk, B_TILE, H_pad), lambda b, c: (c, b, 0)),
                pl.BlockSpec(memory_space=pl.ANY),     # W_hh^T stays in HBM; copied once
            ],
            out_specs=pl.BlockSpec((t_chunk, B_TILE, H_pad), lambda b, c: (c, b, 0)),
            scratch_shapes=[
                pltpu.VMEM((B_TILE, H_pad), f32),      # carried hidden state
                pltpu.VMEM((H_pad, H_pad), f32),       # single-buffered W_hh^T
                pltpu.SemaphoreType.DMA,               # weight-copy completion
            ],
        ),
        compiler_params=pltpu.CompilerParams(
            dimension_semantics=("parallel", "arbitrary"),
            vmem_limit_bytes=vmem_limit),
    )(x_proj, w_hh_t_p)

    # TODO(synk): dropout is identity (eval mode); training-mode dropout would need a
    # pltpu.prng_random_bits mask applied to hs before the output Linear.

    # ---- hoisted output Linear: lane-dense GEMM on the still-padded hidden states ----
    w_lin_p = jnp.pad(w_lin.astype(f32), ((0, 0), (0, H_pad - H)))       # (O, H_pad)
    out_flat = hs.reshape(T_pad * B_pad, H_pad) @ w_lin_p.T + b_lin.astype(f32)
    out = out_flat.reshape(T_pad, B_pad, O)[:T, :B, :]                   # (T, B, O)
    return jnp.transpose(out, (1, 2, 0))                                 # (B, O, T)


def _reference_forward(x, params):
    """Pure-JAX reference of the PyTorch forward (eval mode)."""
    w_ih, w_hh, b_ih, b_hh, w_lin, b_lin = (
        params["w_ih"], params["w_hh"], params["b_ih"],
        params["b_hh"], params["w_lin"], params["b_lin"])
    xt = jnp.swapaxes(x, 1, 2)                     # (B, T, I)
    B, T, _ = xt.shape
    H = w_ih.shape[0]

    def step(h, x_t):
        h_new = jnp.tanh(x_t @ w_ih.T + b_ih + h @ w_hh.T + b_hh)
        return h_new, h_new

    _, hs = jax.lax.scan(step, jnp.zeros((B, H), jnp.float32),
                         jnp.transpose(xt, (1, 0, 2)))
    hs = jnp.transpose(hs, (1, 0, 2))              # (B, T, H)
    out = hs @ w_lin.T + b_lin                     # (B, T, O)
    return jnp.swapaxes(out, 1, 2)                 # (B, O, T)


if __name__ == "__main__":
    # Small, deterministic config consistent with the module's forward.
    B, input_size, T = 2, 4, 8
    hidden_size, output_size = 32, 4

    key = jax.random.PRNGKey(0)
    ks = jax.random.split(key, 7)
    x = jax.random.normal(ks[0], (B, input_size, T), dtype=jnp.float32)

    scale = 1.0 / jnp.sqrt(hidden_size)
    params = {
        "w_ih": jax.random.uniform(ks[1], (hidden_size, input_size),
                                   minval=-scale, maxval=scale, dtype=jnp.float32),
        "w_hh": jax.random.uniform(ks[2], (hidden_size, hidden_size),
                                   minval=-scale, maxval=scale, dtype=jnp.float32),
        "b_ih": jax.random.uniform(ks[3], (hidden_size,),
                                   minval=-scale, maxval=scale, dtype=jnp.float32),
        "b_hh": jax.random.uniform(ks[4], (hidden_size,),
                                   minval=-scale, maxval=scale, dtype=jnp.float32),
        "w_lin": jax.random.uniform(ks[5], (output_size, hidden_size),
                                    minval=-scale, maxval=scale, dtype=jnp.float32),
        "b_lin": jax.random.uniform(ks[6], (output_size,),
                                    minval=-scale, maxval=scale, dtype=jnp.float32),
    }

    out = rnn_vanilla_forward(x, params)
    out = jax.block_until_ready(out)

    ref = jax.block_until_ready(_reference_forward(x, params))
    assert out.shape == (B, output_size, T), out.shape
    assert jnp.allclose(out, ref, atol=1e-4, rtol=1e-4), "mismatch vs reference"

    print("KERNEL_OK")
</pallas_src>

<mosaic_0001>
module attributes {stable_mosaic.version = 11 : i64} {
  func.func @_rnn_recurrence_kernel(%arg0: i32, %arg1: i32, %arg2: memref<8x8x128xf32, #tpu.memory_space<vmem>>, %arg3: memref<128x128xf32, #tpu.memory_space<any>>, %arg4: memref<8x8x128xf32, #tpu.memory_space<vmem>>, %arg5: memref<8x128xf32, #tpu.memory_space<vmem>>, %arg6: memref<128x128xf32, #tpu.memory_space<vmem>>, %arg7: memref<!tpu.dma_semaphore, #tpu.memory_space<semaphore_mem>>) attributes {dimension_semantics = [#tpu.dimension_semantics<parallel>, #tpu.dimension_semantics<arbitrary>], iteration_bounds = array<i64: 1, 1>, scalar_prefetch = 0 : i64, scratch_operands = 3 : i64, tpu.core_type = #tpu.core_type<tc>, window_params = [{transform_indices = @transform_0, window_bounds = array<i64: 8, 8, 128>}, {}, {transform_indices = @transform_2, window_bounds = array<i64: 8, 8, 128>}]} {
    %c0_i32 = arith.constant 0 : i32
    %0 = arith.cmpi eq, %arg1, %c0_i32 : i32
    %1 = arith.extui %0 : i1 to i32
    %c0_i32_0 = arith.constant 0 : i32
    %2 = arith.cmpi ne, %1, %c0_i32_0 : i32
    scf.if %2 {
      %cst_46 = arith.constant 0.000000e+00 : f32
      %86 = vector.broadcast %cst_46 : f32 to vector<8x128xf32>
      %c0_47 = arith.constant 0 : index
      %c0_48 = arith.constant 0 : index
      %87 = vector.load %arg5[%c0_47, %c0_48] : memref<8x128xf32, #tpu.memory_space<vmem>>, vector<8x128xf32>
      tpu.vector_store %arg5[%c0_47, %c0_48], %86 {strides = array<i32>} : memref<8x128xf32, #tpu.memory_space<vmem>>, vector<8x128xf32>,
      tpu.enqueue_dma source(%arg3 : memref<128x128xf32, #tpu.memory_space<any>>) target(%arg6 : memref<128x128xf32, #tpu.memory_space<vmem>>) target_semaphore(%arg7 : memref<!tpu.dma_semaphore, #tpu.memory_space<semaphore_mem>>)
      tpu.wait_dma2 semaphore(%arg7 : memref<!tpu.dma_semaphore, #tpu.memory_space<semaphore_mem>>) src(%arg3 : memref<128x128xf32, #tpu.memory_space<any>>) dst(%arg6 : memref<128x128xf32, #tpu.memory_space<vmem>>)
    } else {
    }
    %c0 = arith.constant 0 : index
    %c0_1 = arith.constant 0 : index
    %3 = vector.load %arg6[%c0, %c0_1] : memref<128x128xf32, #tpu.memory_space<vmem>>, vector<128x128xf32>
    %c0_2 = arith.constant 0 : index
    %c0_3 = arith.constant 0 : index
    %4 = vector.load %arg5[%c0_2, %c0_3] : memref<8x128xf32, #tpu.memory_space<vmem>>, vector<8x128xf32>
    %c0_i32_4 = arith.constant 0 : i32
    %5 = arith.index_cast %c0_i32_4 : i32 to index
    %c0_5 = arith.constant 0 : index
    %c0_6 = arith.constant 0 : index
    %6 = vector.load %arg2[%5, %c0_5, %c0_6] : memref<8x8x128xf32, #tpu.memory_space<vmem>>, vector<1x8x128xf32>
    %7 = vector.shape_cast %6 : vector<1x8x128xf32> to vector<8x128xf32>
    %cst = arith.constant dense<0.000000e+00> : vector<8x128xf32>
    %8 = tpu.matmul %4, %3, %cst {dimension_numbers = #tpu.dot_dimension_numbers<[1], [0], [0], [1], [0, 0, 1, 1], [], []>} : vector<8x128xf32>, vector<128x128xf32>, vector<8x128xf32> -> vector<8x128xf32>
    %9 = arith.addf %7, %8 : vector<8x128xf32>
    %10 = math.tanh %9 : vector<8x128xf32>
    %11 = arith.index_cast %c0_i32_4 : i32 to index
    %c0_7 = arith.constant 0 : index
    %c0_8 = arith.constant 0 : index
    %12 = vector.load %arg4[%11, %c0_7, %c0_8] : memref<8x8x128xf32, #tpu.memory_space<vmem>>, vector<1x8x128xf32>
    %13 = vector.shape_cast %12 : vector<1x8x128xf32> to vector<8x128xf32>
    %14 = vector.shape_cast %10 : vector<8x128xf32> to vector<1x8x128xf32>
    tpu.vector_store %arg4[%11, %c0_7, %c0_8], %14 {strides = array<i32>} : memref<8x8x128xf32, #tpu.memory_space<vmem>>, vector<1x8x128xf32>,
    %c1_i32 = arith.constant 1 : i32
    %15 = arith.index_cast %c1_i32 : i32 to index
    %c0_9 = arith.constant 0 : index
    %c0_10 = arith.constant 0 : index
    %16 = vector.load %arg2[%15, %c0_9, %c0_10] : memref<8x8x128xf32, #tpu.memory_space<vmem>>, vector<1x8x128xf32>
    %17 = vector.shape_cast %16 : vector<1x8x128xf32> to vector<8x128xf32>
    %cst_11 = arith.constant dense<0.000000e+00> : vector<8x128xf32>
    %18 = tpu.matmul %10, %3, %cst_11 {dimension_numbers = #tpu.dot_dimension_numbers<[1], [0], [0], [1], [0, 0, 1, 1], [], []>} : vector<8x128xf32>, vector<128x128xf32>, vector<8x128xf32> -> vector<8x128xf32>
    %19 = arith.addf %17, %18 : vector<8x128xf32>
    %20 = math.tanh %19 : vector<8x128xf32>
    %21 = arith.index_cast %c1_i32 : i32 to index
    %c0_12 = arith.constant 0 : index
    %c0_13 = arith.constant 0 : index
    %22 = vector.load %arg4[%21, %c0_12, %c0_13] : memref<8x8x128xf32, #tpu.memory_space<vmem>>, vector<1x8x128xf32>
    %23 = vector.shape_cast %22 : vector<1x8x128xf32> to vector<8x128xf32>
    %24 = vector.shape_cast %20 : vector<8x128xf32> to vector<1x8x128xf32>
    tpu.vector_store %arg4[%21, %c0_12, %c0_13], %24 {strides = array<i32>} : memref<8x8x128xf32, #tpu.memory_space<vmem>>, vector<1x8x128xf32>,
    %c2_i32 = arith.constant 2 : i32
    %25 = arith.index_cast %c2_i32 : i32 to index
    %c0_14 = arith.constant 0 : index
    %c0_15 = arith.constant 0 : index
    %26 = vector.load %arg2[%25, %c0_14, %c0_15] : memref<8x8x128xf32, #tpu.memory_space<vmem>>, vector<1x8x128xf32>
    %27 = vector.shape_cast %26 : vector<1x8x128xf32> to vector<8x128xf32>
    %cst_16 = arith.constant dense<0.000000e+00> : vector<8x128xf32>
    %28 = tpu.matmul %20, %3, %cst_16 {dimension_numbers = #tpu.dot_dimension_numbers<[1], [0], [0], [1], [0, 0, 1, 1], [], []>} : vector<8x128xf32>, vector<128x128xf32>, vector<8x128xf32> -> vector<8x128xf32>
    %29 = arith.addf %27, %28 : vector<8x128xf32>
    %30 = math.tanh %29 : vector<8x128xf32>
    %31 = arith.index_cast %c2_i32 : i32 to index
    %c0_17 = arith.constant 0 : index
    %c0_18 = arith.constant 0 : index
    %32 = vector.load %arg4[%31, %c0_17, %c0_18] : memref<8x8x128xf32, #tpu.memory_space<vmem>>, vector<1x8x128xf32>
    %33 = vector.shape_cast %32 : vector<1x8x128xf32> to vector<8x128xf32>
    %34 = vector.shape_cast %30 : vector<8x128xf32> to vector<1x8x128xf32>
    tpu.vector_store %arg4[%31, %c0_17, %c0_18], %34 {strides = array<i32>} : memref<8x8x128xf32, #tpu.memory_space<vmem>>, vector<1x8x128xf32>,
    %c3_i32 = arith.constant 3 : i32
    %35 = arith.index_cast %c3_i32 : i32 to index
    %c0_19 = arith.constant 0 : index
    %c0_20 = arith.constant 0 : index
    %36 = vector.load %arg2[%35, %c0_19, %c0_20] : memref<8x8x128xf32, #tpu.memory_space<vmem>>, vector<1x8x128xf32>
    %37 = vector.shape_cast %36 : vector<1x8x128xf32> to vector<8x128xf32>
    %cst_21 = arith.constant dense<0.000000e+00> : vector<8x128xf32>
    %38 = tpu.matmul %30, %3, %cst_21 {dimension_numbers = #tpu.dot_dimension_numbers<[1], [0], [0], [1], [0, 0, 1, 1], [], []>} : vector<8x128xf32>, vector<128x128xf32>, vector<8x128xf32> -> vector<8x128xf32>
    %39 = arith.addf %37, %38 : vector<8x128xf32>
    %40 = math.tanh %39 : vector<8x128xf32>
    %41 = arith.index_cast %c3_i32 : i32 to index
    %c0_22 = arith.constant 0 : index
    %c0_23 = arith.constant 0 : index
    %42 = vector.load %arg4[%41, %c0_22, %c0_23] : memref<8x8x128xf32, #tpu.memory_space<vmem>>, vector<1x8x128xf32>
    %43 = vector.shape_cast %42 : vector<1x8x128xf32> to vector<8x128xf32>
    %44 = vector.shape_cast %40 : vector<8x128xf32> to vector<1x8x128xf32>
    tpu.vector_store %arg4[%41, %c0_22, %c0_23], %44 {strides = array<i32>} : memref<8x8x128xf32, #tpu.memory_space<vmem>>, vector<1x8x128xf32>,
    %c4_i32 = arith.constant 4 : i32
    %45 = arith.index_cast %c4_i32 : i32 to index
    %c0_24 = arith.constant 0 : index
    %c0_25 = arith.constant 0 : index
    %46 = vector.load %arg2[%45, %c0_24, %c0_25] : memref<8x8x128xf32, #tpu.memory_space<vmem>>, vector<1x8x128xf32>
    %47 = vector.shape_cast %46 : vector<1x8x128xf32> to vector<8x128xf32>
    %cst_26 = arith.constant dense<0.000000e+00> : vector<8x128xf32>
    %48 = tpu.matmul %40, %3, %cst_26 {dimension_numbers = #tpu.dot_dimension_numbers<[1], [0], [0], [1], [0, 0, 1, 1], [], []>} : vector<8x128xf32>, vector<128x128xf32>, vector<8x128xf32> -> vector<8x128xf32>
    %49 = arith.addf %47, %48 : vector<8x128xf32>
    %50 = math.tanh %49 : vector<8x128xf32>
    %51 = arith.index_cast %c4_i32 : i32 to index
    %c0_27 = arith.constant 0 : index
    %c0_28 = arith.constant 0 : index
    %52 = vector.load %arg4[%51, %c0_27, %c0_28] : memref<8x8x128xf32, #tpu.memory_space<vmem>>, vector<1x8x128xf32>
    %53 = vector.shape_cast %52 : vector<1x8x128xf32> to vector<8x128xf32>
    %54 = vector.shape_cast %50 : vector<8x128xf32> to vector<1x8x128xf32>
    tpu.vector_store %arg4[%51, %c0_27, %c0_28], %54 {strides = array<i32>} : memref<8x8x128xf32, #tpu.memory_space<vmem>>, vector<1x8x128xf32>,
    %c5_i32 = arith.constant 5 : i32
    %55 = arith.index_cast %c5_i32 : i32 to index
    %c0_29 = arith.constant 0 : index
    %c0_30 = arith.constant 0 : index
    %56 = vector.load %arg2[%55, %c0_29, %c0_30] : memref<8x8x128xf32, #tpu.memory_space<vmem>>, vector<1x8x128xf32>
    %57 = vector.shape_cast %56 : vector<1x8x128xf32> to vector<8x128xf32>
    %cst_31 = arith.constant dense<0.000000e+00> : vector<8x128xf32>
    %58 = tpu.matmul %50, %3, %cst_31 {dimension_numbers = #tpu.dot_dimension_numbers<[1], [0], [0], [1], [0, 0, 1, 1], [], []>} : vector<8x128xf32>, vector<128x128xf32>, vector<8x128xf32> -> vector<8x128xf32>
    %59 = arith.addf %57, %58 : vector<8x128xf32>
    %60 = math.tanh %59 : vector<8x128xf32>
    %61 = arith.index_cast %c5_i32 : i32 to index
    %c0_32 = arith.constant 0 : index
    %c0_33 = arith.constant 0 : index
    %62 = vector.load %arg4[%61, %c0_32, %c0_33] : memref<8x8x128xf32, #tpu.memory_space<vmem>>, vector<1x8x128xf32>
    %63 = vector.shape_cast %62 : vector<1x8x128xf32> to vector<8x128xf32>
    %64 = vector.shape_cast %60 : vector<8x128xf32> to vector<1x8x128xf32>
    tpu.vector_store %arg4[%61, %c0_32, %c0_33], %64 {strides = array<i32>} : memref<8x8x128xf32, #tpu.memory_space<vmem>>, vector<1x8x128xf32>,
    %c6_i32 = arith.constant 6 : i32
    %65 = arith.index_cast %c6_i32 : i32 to index
    %c0_34 = arith.constant 0 : index
    %c0_35 = arith.constant 0 : index
    %66 = vector.load %arg2[%65, %c0_34, %c0_35] : memref<8x8x128xf32, #tpu.memory_space<vmem>>, vector<1x8x128xf32>
    %67 = vector.shape_cast %66 : vector<1x8x128xf32> to vector<8x128xf32>
    %cst_36 = arith.constant dense<0.000000e+00> : vector<8x128xf32>
    %68 = tpu.matmul %60, %3, %cst_36 {dimension_numbers = #tpu.dot_dimension_numbers<[1], [0], [0], [1], [0, 0, 1, 1], [], []>} : vector<8x128xf32>, vector<128x128xf32>, vector<8x128xf32> -> vector<8x128xf32>
    %69 = arith.addf %67, %68 : vector<8x128xf32>
    %70 = math.tanh %69 : vector<8x128xf32>
    %71 = arith.index_cast %c6_i32 : i32 to index
    %c0_37 = arith.constant 0 : index
    %c0_38 = arith.constant 0 : index
    %72 = vector.load %arg4[%71, %c0_37, %c0_38] : memref<8x8x128xf32, #tpu.memory_space<vmem>>, vector<1x8x128xf32>
    %73 = vector.shape_cast %72 : vector<1x8x128xf32> to vector<8x128xf32>
    %74 = vector.shape_cast %70 : vector<8x128xf32> to vector<1x8x128xf32>
    tpu.vector_store %arg4[%71, %c0_37, %c0_38], %74 {strides = array<i32>} : memref<8x8x128xf32, #tpu.memory_space<vmem>>, vector<1x8x128xf32>,
    %c7_i32 = arith.constant 7 : i32
    %75 = arith.index_cast %c7_i32 : i32 to index
    %c0_39 = arith.constant 0 : index
    %c0_40 = arith.constant 0 : index
    %76 = vector.load %arg2[%75, %c0_39, %c0_40] : memref<8x8x128xf32, #tpu.memory_space<vmem>>, vector<1x8x128xf32>
    %77 = vector.shape_cast %76 : vector<1x8x128xf32> to vector<8x128xf32>
    %cst_41 = arith.constant dense<0.000000e+00> : vector<8x128xf32>
    %78 = tpu.matmul %70, %3, %cst_41 {dimension_numbers = #tpu.dot_dimension_numbers<[1], [0], [0], [1], [0, 0, 1, 1], [], []>} : vector<8x128xf32>, vector<128x128xf32>, vector<8x128xf32> -> vector<8x128xf32>
    %79 = arith.addf %77, %78 : vector<8x128xf32>
    %80 = math.tanh %79 : vector<8x128xf32>
    %81 = arith.index_cast %c7_i32 : i32 to index
    %c0_42 = arith.constant 0 : index
    %c0_43 = arith.constant 0 : index
    %82 = vector.load %arg4[%81, %c0_42, %c0_43] : memref<8x8x128xf32, #tpu.memory_space<vmem>>, vector<1x8x128xf32>
    %83 = vector.shape_cast %82 : vector<1x8x128xf32> to vector<8x128xf32>
    %84 = vector.shape_cast %80 : vector<8x128xf32> to vector<1x8x128xf32>
    tpu.vector_store %arg4[%81, %c0_42, %c0_43], %84 {strides = array<i32>} : memref<8x8x128xf32, #tpu.memory_space<vmem>>, vector<1x8x128xf32>,
    %c8_i32 = arith.constant 8 : i32
    %c0_44 = arith.constant 0 : index
    %c0_45 = arith.constant 0 : index
    %85 = vector.load %arg5[%c0_44, %c0_45] : memref<8x128xf32, #tpu.memory_space<vmem>>, vector<8x128xf32>
    tpu.vector_store %arg5[%c0_44, %c0_45], %80 {strides = array<i32>} : memref<8x128xf32, #tpu.memory_space<vmem>>, vector<8x128xf32>,
    return
  }
  func.func @transform_0(%arg0: i32, %arg1: i32) -> (i32, i32, i32) {
    %c0_i32 = arith.constant 0 : i32
    %c0_i32_0 = arith.constant 0 : i32
    return %arg1, %arg0, %c0_i32 : i32, i32, i32
  }
  func.func @transform_2(%arg0: i32, %arg1: i32) -> (i32, i32, i32) {
    %c0_i32 = arith.constant 0 : i32
    %c0_i32_0 = arith.constant 0 : i32
    return %arg1, %arg0, %c0_i32 : i32, i32, i32
  }
}

</mosaic_0001>

<llo_original>
// kernel: tpu_custom_call.1
$region0: #{tpu_custom_call.1}
  #allocation0 [shape = 'u32[]', space=smem, size = 0x4, offset = 0x4, fixed_abs, tag = 'smem constant byte address 0x4 - core index']
  #allocation1 [shape = 'u32[144,128]{1,0:T(1,128)}', space=vmem, size = 0x12000, scoped, tag = 'internal scratch']
  #allocation2 [shape = 'f32[8,128]{1,0:T(8,128)}', space=vmem, size = 0x1000, scoped, tag = 'scratch operand']
  #allocation3 [shape = 'f32[128,128]{1,0:T(8,128)}', space=vmem, size = 0x10000, scoped, tag = 'scratch operand']
  #allocation4 [shape = 's32[1]{0}', space=sflag, size = 0x4, scoped, tag = 'scratch operand']
  #allocation9 [shape = 's32[]', space=sflag, size = 0x4, offset = 0, fixed_abs, tag = 'sflag constant byte address 0x0 - dummy sync flag']
  #allocation10 [shape = 's32[]', space=sflag, size = 0x4, offset = 0, fixed_abs, tag = 'sflag constant byte address 0x0 - dummy sync flag']
  #allocation11 [shape = 'u32[]', space=smem, size = 0x4, offset = 0x44, fixed_abs, tag = 'smem constant byte address 0x44 - assertion arg 0']
  #allocation12 [shape = 'u32[]', space=smem, size = 0x4, offset = 0x48, fixed_abs, tag = 'smem constant byte address 0x48 - assertion arg 1']
  %s0 = inlined_call_operand.hbm [shape: f32[8,8,128], index: 0, kind: input, shape index: {}]
  %s1 = inlined_call_operand.hbm [shape: f32[128,128], index: 1, kind: input, shape index: {}]
  %s2 = inlined_call_operand.hbm [shape: f32[8,8,128], index: 2, kind: output, shape index: {}]
  %s3 = sld [smem:[#allocation0]]
  $region26: #{tpu_custom_call.1} parent=0
    _
  %s5 = ssub.s32 1, %s3
  %s6 = scalar_select 0, %s5, %s3
  $region1: #{tpu_custom_call.1} parent=0
    #allocation5 [shape = 'u8[32768]{0}', space=vmem, size = 0x8000, scoped, tag = 'input window, operand 0, single buffered']
    #allocation6 [shape = 's32[1]{0}', space=sflag, size = 0x4, scoped, tag = 'scoped memory for tpu_custom_call.1']
    #allocation7 [shape = 's32[1]{0}', space=sflag, size = 0x4, scoped, tag = 'scoped memory for tpu_custom_call.1']
    #allocation8 [shape = 'u8[32768]{0}', space=vmem, size = 0x8000, scoped, tag = 'output window, operand 0, single buffered']
    %7 = vsyncpa [#allocation6], 0
    %8 = vsyncpa [#allocation7], 0
    // Predicated region
    $region2: #{tpu_custom_call.1} parent=1 // pred_check
      _
    $region3: #{tpu_custom_call.1} parent=1 // pred_check_branch
      %10 = sbr.rel (0) target = $region5
    $region4: #{tpu_custom_call.1} parent=1 // pred_region
      %s12 = ssub.s32 1024, 1024
      %13 = vsyncadd [#allocation6], %s12
      %s14 = sshll.u32 [#allocation5], 4
      %s15 = int_to_ptr.vmem [resolvable:$true] %s14
      %20 = dma.hbm_to_vmem [thread:$0]  %s0, 1024, %s15, [#allocation6], 128, 128, 8
    $region5: #{tpu_custom_call.1} parent=1 // pred_fallthru
      _
    // Predicated region
    $region6: #{tpu_custom_call.1} parent=1 // pred_check
      _
    $region7: #{tpu_custom_call.1} parent=1 // pred_check_branch
      %22 = sbr.rel (0) target = $region9
    $region8: #{tpu_custom_call.1} parent=1 // pred_region
      %23 = dma.done [#allocation6], 1024
    $region9: #{tpu_custom_call.1} parent=1 // pred_fallthru
      _
    %p24 = scmp.eq.s32.totalorder 0, 0
    // Predicated region
    $region10: #{tpu_custom_call.1} parent=1 // pred_check
      %p25 = pneg %p24
    $region11: #{tpu_custom_call.1} parent=1 // pred_check_branch
      %27 = sbr.rel (%p25) target = $region13
    $region12: #{tpu_custom_call.1} parent=1 // pred_region
      %28 = vst [vmem:[#allocation2] sm:$0xff] 0.0
      // Predicated region
      $region14: #{tpu_custom_call.1} parent=12 // pred_check
        _
      $region15: #{tpu_custom_call.1} parent=12 // pred_check_branch
        %30 = sbr.rel target = $region17
      $region16: #{tpu_custom_call.1} parent=12 // pred_region
        %31 = sst [smem:[#allocation11]] [#allocation10]
        %32 = sst [smem:[#allocation12]] [#allocation9]
      $region17: #{tpu_custom_call.1} parent=12 // pred_fallthru
        _
      %34 = shalt.err (0)
      %s36 = sshll.u32 [#allocation3], 4
      %s37 = int_to_ptr.vmem [resolvable:$true] %s36
      %39 = dma.hbm_to_vmem [thread:$0]  %s1, 2048, %s37, [#allocation4]
      %s40 = smul.u32 128, 1
      %s41 = sshll.u32 %s40, 4
      %42 = dma.done [#allocation4], %s41
    $region13: #{tpu_custom_call.1} parent=1 // pred_fallthru
      _
    %v43 = vld [vmem:[#allocation3] sm:$0xff]
    %v44 = vld [vmem:[#allocation3 + $0x8] sm:$0xff]
    %v45 = vld [vmem:[#allocation3 + $0x10] sm:$0xff]
    %v46 = vld [vmem:[#allocation3 + $0x18] sm:$0xff]
    %v47 = vld [vmem:[#allocation3 + $0x20] sm:$0xff]
    %v48 = vld [vmem:[#allocation3 + $0x28] sm:$0xff]
    %v49 = vld [vmem:[#allocation3 + $0x30] sm:$0xff]
    %v50 = vld [vmem:[#allocation3 + $0x38] sm:$0xff]
    %v51 = vld [vmem:[#allocation3 + $0x40] sm:$0xff]
    %v52 = vld [vmem:[#allocation3 + $0x48] sm:$0xff]
    %v53 = vld [vmem:[#allocation3 + $0x50] sm:$0xff]
    %v54 = vld [vmem:[#allocation3 + $0x58] sm:$0xff]
    %v55 = vld [vmem:[#allocation3 + $0x60] sm:$0xff]
    %v56 = vld [vmem:[#allocation3 + $0x68] sm:$0xff]
    %v57 = vld [vmem:[#allocation3 + $0x70] sm:$0xff]
    %v58 = vld [vmem:[#allocation3 + $0x78] sm:$0xff]
    %v59 = vld [vmem:[#allocation2] sm:$0xff]
    %v60 = vld [vmem:[#allocation5] sm:$0xff]
    %61 = vmatprep.subr.mxu0 0.0
    %62 = vmatpush1.msra.mxu0 %v43
    %63 = vmatprep.subr.mxu0 0.0
    %64 = vmatpush1.msra.mxu0 %v44
    %65 = vmatprep.subr.mxu0 0.0
    %66 = vmatpush1.msra.mxu0 %v45
    %67 = vmatprep.subr.mxu0 0.0
    %68 = vmatpush1.msra.mxu0 %v46
    %69 = vmatprep.subr.mxu0 0.0
    %70 = vmatpush1.msra.mxu0 %v47
    %71 = vmatprep.subr.mxu0 0.0
    %72 = vmatpush1.msra.mxu0 %v48
    %73 = vmatprep.subr.mxu0 0.0
    %74 = vmatpush1.msra.mxu0 %v49
    %75 = vmatprep.subr.mxu0 0.0
    %76 = vmatpush1.msra.mxu0 %v50
    %77 = vmatprep.subr.mxu0 0.0
    %78 = vmatpush1.msra.mxu0 %v51
    %79 = vmatprep.subr.mxu0 0.0
    %80 = vmatpush1.msra.mxu0 %v52
    %81 = vmatprep.subr.mxu0 0.0
    %82 = vmatpush1.msra.mxu0 %v53
    %83 = vmatprep.subr.mxu0 0.0
    %84 = vmatpush1.msra.mxu0 %v54
    %85 = vmatprep.subr.mxu0 0.0
    %86 = vmatpush1.msra.mxu0 %v55
    %87 = vmatprep.subr.mxu0 0.0
    %88 = vmatpush1.msra.mxu0 %v56
    %89 = vmatprep.subr.mxu0 0.0
    %90 = vmatpush1.msra.mxu0 %v57
    %91 = vmatprep.subr.mxu0 0.0
    %92 = vmatpush1.msra.mxu0 %v58
    %93 = vmatprep.subr.mxu0 0.0
    %94 = vmatpush1.msra.mxu0 0.0
    %95 = vmatprep.subr.mxu0 0.0
    %96 = vmatpush1.msra.mxu0 0.0
    %97 = vmatprep.subr.mxu0 0.0
    %98 = vmatpush1.msra.mxu0 0.0
    %99 = vmatprep.subr.mxu0 0.0
    %100 = vmatpush1.msra.mxu0 0.0
    %101 = vmatprep.subr.mxu0 0.0
    %102 = vmatpush1.msra.mxu0 0.0
    %103 = vmatprep.subr.mxu0 0.0
    %104 = vmatpush1.msra.mxu0 0.0
    %105 = vmatprep.subr.mxu0 0.0
    %106 = vmatpush1.msra.mxu0 0.0
    %107 = vmatprep.subr.mxu0 0.0
    %108 = vmatpush1.msra.mxu0 0.0
    %109 = vmatprep.subr.mxu0 0.0
    %110 = vmatpush1.msra.mxu0 0.0
    %111 = vmatprep.subr.mxu0 0.0
    %112 = vmatpush1.msra.mxu0 0.0
    %113 = vmatprep.subr.mxu0 0.0
    %114 = vmatpush1.msra.mxu0 0.0
    %115 = vmatprep.subr.mxu0 0.0
    %116 = vmatpush1.msra.mxu0 0.0
    %117 = vmatprep.subr.mxu0 0.0
    %118 = vmatpush1.msra.mxu0 0.0
    %119 = vmatprep.subr.mxu0 0.0
    %120 = vmatpush1.msra.mxu0 0.0
    %121 = vmatprep.subr.mxu0 0.0
    %122 = vmatpush1.msra.mxu0 0.0
    %123 = vmatprep.subr.mxu0 0.0
    %124 = vmatpush1.msra.mxu0 0.0
    %125 = vmatprep.mubr.f32.mxu0 0.0
    %126 = vmatmul.mubr.f32.gmra.mrb[0].mxu0 %v59
    %v127 = vpop.f32.mrb[0].mxu0
    %v128 = vadd.f32 0.0, %v127
    %v129 = vpop.f32.mrb[0].mxu0
    %130 = vdwg.mxu0
    %v131 = vadd.f32 %v60, %v128
    %v132 = vtanh.pop %v131
    %133 = vst [vmem:[#allocation8] sm:$0xff] %v132
    %s134 = scalar_lea.vmem [#allocation5], 8
    %v135 = vld [vmem:[%s134] sm:$0xff]
    %136 = vmatprep.subr.mxu0 0.0
    %137 = vmatpush1.msra.mxu0 %v43
    %138 = vmatprep.subr.mxu0 0.0
    %139 = vmatpush1.msra.mxu0 %v44
    %140 = vmatprep.subr.mxu0 0.0
    %141 = vmatpush1.msra.mxu0 %v45
    %142 = vmatprep.subr.mxu0 0.0
    %143 = vmatpush1.msra.mxu0 %v46
    %144 = vmatprep.subr.mxu0 0.0
    %145 = vmatpush1.msra.mxu0 %v47
    %146 = vmatprep.subr.mxu0 0.0
    %147 = vmatpush1.msra.mxu0 %v48
    %148 = vmatprep.subr.mxu0 0.0
    %149 = vmatpush1.msra.mxu0 %v49
    %150 = vmatprep.subr.mxu0 0.0
    %151 = vmatpush1.msra.mxu0 %v50
    %152 = vmatprep.subr.mxu0 0.0
    %153 = vmatpush1.msra.mxu0 %v51
    %154 = vmatprep.subr.mxu0 0.0
    %155 = vmatpush1.msra.mxu0 %v52
    %156 = vmatprep.subr.mxu0 0.0
    %157 = vmatpush1.msra.mxu0 %v53
    %158 = vmatprep.subr.mxu0 0.0
    %159 = vmatpush1.msra.mxu0 %v54
    %160 = vmatprep.subr.mxu0 0.0
    %161 = vmatpush1.msra.mxu0 %v55
    %162 = vmatprep.subr.mxu0 0.0
    %163 = vmatpush1.msra.mxu0 %v56
    %164 = vmatprep.subr.mxu0 0.0
    %165 = vmatpush1.msra.mxu0 %v57
    %166 = vmatprep.subr.mxu0 0.0
    %167 = vmatpush1.msra.mxu0 %v58
    %168 = vmatprep.subr.mxu0 0.0
    %169 = vmatpush1.msra.mxu0 0.0
    %170 = vmatprep.subr.mxu0 0.0
    %171 = vmatpush1.msra.mxu0 0.0
    %172 = vmatprep.subr.mxu0 0.0
    %173 = vmatpush1.msra.mxu0 0.0
    %174 = vmatprep.subr.mxu0 0.0
    %175 = vmatpush1.msra.mxu0 0.0
    %176 = vmatprep.subr.mxu0 0.0
    %177 = vmatpush1.msra.mxu0 0.0
    %178 = vmatprep.subr.mxu0 0.0
    %179 = vmatpush1.msra.mxu0 0.0
    %180 = vmatprep.subr.mxu0 0.0
    %181 = vmatpush1.msra.mxu0 0.0
    %182 = vmatprep.subr.mxu0 0.0
    %183 = vmatpush1.msra.mxu0 0.0
    %184 = vmatprep.subr.mxu0 0.0
    %185 = vmatpush1.msra.mxu0 0.0
    %186 = vmatprep.subr.mxu0 0.0
    %187 = vmatpush1.msra.mxu0 0.0
    %188 = vmatprep.subr.mxu0 0.0
    %189 = vmatpush1.msra.mxu0 0.0
    %190 = vmatprep.subr.mxu0 0.0
    %191 = vmatpush1.msra.mxu0 0.0
    %192 = vmatprep.subr.mxu0 0.0
    %193 = vmatpush1.msra.mxu0 0.0
    %194 = vmatprep.subr.mxu0 0.0
    %195 = vmatpush1.msra.mxu0 0.0
    %196 = vmatprep.subr.mxu0 0.0
    %197 = vmatpush1.msra.mxu0 0.0
    %198 = vmatprep.subr.mxu0 0.0
    %199 = vmatpush1.msra.mxu0 0.0
    %200 = vmatprep.mubr.f32.mxu0 0.0
    %201 = vmatmul.mubr.f32.gmra.mrb[0].mxu0 %v132
    %v202 = vpop.f32.mrb[0].mxu0
    %v203 = vadd.f32 0.0, %v202
    %v204 = vpop.f32.mrb[0].mxu0
    %205 = vdwg.mxu0
    %v206 = vadd.f32 %v135, %v203
    %v207 = vtanh.pop %v206
    %s208 = scalar_lea.vmem [#allocation8], 8
    %209 = vst [vmem:[%s208] sm:$0xff] %v207
    %s210 = scalar_lea.vmem [#allocation5], 16
    %v211 = vld [vmem:[%s210] sm:$0xff]
    %212 = vmatprep.subr.mxu0 0.0
    %213 = vmatpush1.msra.mxu0 %v43
    %214 = vmatprep.subr.mxu0 0.0
    %215 = vmatpush1.msra.mxu0 %v44
    %216 = vmatprep.subr.mxu0 0.0
    %217 = vmatpush1.msra.mxu0 %v45
    %218 = vmatprep.subr.mxu0 0.0
    %219 = vmatpush1.msra.mxu0 %v46
    %220 = vmatprep.subr.mxu0 0.0
    %221 = vmatpush1.msra.mxu0 %v47
    %222 = vmatprep.subr.mxu0 0.0
    %223 = vmatpush1.msra.mxu0 %v48
    %224 = vmatprep.subr.mxu0 0.0
    %225 = vmatpush1.msra.mxu0 %v49
    %226 = vmatprep.subr.mxu0 0.0
    %227 = vmatpush1.msra.mxu0 %v50
    %228 = vmatprep.subr.mxu0 0.0
    %229 = vmatpush1.msra.mxu0 %v51
    %230 = vmatprep.subr.mxu0 0.0
    %231 = vmatpush1.msra.mxu0 %v52
    %232 = vmatprep.subr.mxu0 0.0
    %233 = vmatpush1.msra.mxu0 %v53
    %234 = vmatprep.subr.mxu0 0.0
    %235 = vmatpush1.msra.mxu0 %v54
    %236 = vmatprep.subr.mxu0 0.0
    %237 = vmatpush1.msra.mxu0 %v55
    %238 = vmatprep.subr.mxu0 0.0
    %239 = vmatpush1.msra.mxu0 %v56
    %240 = vmatprep.subr.mxu0 0.0
    %241 = vmatpush1.msra.mxu0 %v57
    %242 = vmatprep.subr.mxu0 0.0
    %243 = vmatpush1.msra.mxu0 %v58
    %244 = vmatprep.subr.mxu0 0.0
    %245 = vmatpush1.msra.mxu0 0.0
    %246 = vmatprep.subr.mxu0 0.0
    %247 = vmatpush1.msra.mxu0 0.0
    %248 = vmatprep.subr.mxu0 0.0
    %249 = vmatpush1.msra.mxu0 0.0
    %250 = vmatprep.subr.mxu0 0.0
    %251 = vmatpush1.msra.mxu0 0.0
    %252 = vmatprep.subr.mxu0 0.0
    %253 = vmatpush1.msra.mxu0 0.0
    %254 = vmatprep.subr.mxu0 0.0
    %255 = vmatpush1.msra.mxu0 0.0
    %256 = vmatprep.subr.mxu0 0.0
    %257 = vmatpush1.msra.mxu0 0.0
    %258 = vmatprep.subr.mxu0 0.0
    %259 = vmatpush1.msra.mxu0 0.0
    %260 = vmatprep.subr.mxu0 0.0
    %261 = vmatpush1.msra.mxu0 0.0
    %262 = vmatprep.subr.mxu0 0.0
    %263 = vmatpush1.msra.mxu0 0.0
    %264 = vmatprep.subr.mxu0 0.0
    %265 = vmatpush1.msra.mxu0 0.0
    %266 = vmatprep.subr.mxu0 0.0
    %267 = vmatpush1.msra.mxu0 0.0
    %268 = vmatprep.subr.mxu0 0.0
    %269 = vmatpush1.msra.mxu0 0.0
    %270 = vmatprep.subr.mxu0 0.0
    %271 = vmatpush1.msra.mxu0 0.0
    %272 = vmatprep.subr.mxu0 0.0
    %273 = vmatpush1.msra.mxu0 0.0
    %274 = vmatprep.subr.mxu0 0.0
    %275 = vmatpush1.msra.mxu0 0.0
    %276 = vmatprep.mubr.f32.mxu0 0.0
    %277 = vmatmul.mubr.f32.gmra.mrb[0].mxu0 %v207
    %v278 = vpop.f32.mrb[0].mxu0
    %v279 = vadd.f32 0.0, %v278
    %v280 = vpop.f32.mrb[0].mxu0
    %281 = vdwg.mxu0
    %v282 = vadd.f32 %v211, %v279
    %v283 = vtanh.pop %v282
    %s284 = scalar_lea.vmem [#allocation8], 16
    %285 = vst [vmem:[%s284] sm:$0xff] %v283
    %s286 = scalar_lea.vmem [#allocation5], 24
    %v287 = vld [vmem:[%s286] sm:$0xff]
    %288 = vmatprep.subr.mxu0 0.0
    %289 = vmatpush1.msra.mxu0 %v43
    %290 = vmatprep.subr.mxu0 0.0
    %291 = vmatpush1.msra.mxu0 %v44
    %292 = vmatprep.subr.mxu0 0.0
    %293 = vmatpush1.msra.mxu0 %v45
    %294 = vmatprep.subr.mxu0 0.0
    %295 = vmatpush1.msra.mxu0 %v46
    %296 = vmatprep.subr.mxu0 0.0
    %297 = vmatpush1.msra.mxu0 %v47
    %298 = vmatprep.subr.mxu0 0.0
    %299 = vmatpush1.msra.mxu0 %v48
    %300 = vmatprep.subr.mxu0 0.0
    %301 = vmatpush1.msra.mxu0 %v49
    %302 = vmatprep.subr.mxu0 0.0
    %303 = vmatpush1.msra.mxu0 %v50
    %304 = vmatprep.subr.mxu0 0.0
    %305 = vmatpush1.msra.mxu0 %v51
    %306 = vmatprep.subr.mxu0 0.0
    %307 = vmatpush1.msra.mxu0 %v52
    %308 = vmatprep.subr.mxu0 0.0
    %309 = vmatpush1.msra.mxu0 %v53
    %310 = vmatprep.subr.mxu0 0.0
    %311 = vmatpush1.msra.mxu0 %v54
    %312 = vmatprep.subr.mxu0 0.0
    %313 = vmatpush1.msra.mxu0 %v55
    %314 = vmatprep.subr.mxu0 0.0
    %315 = vmatpush1.msra.mxu0 %v56
    %316 = vmatprep.subr.mxu0 0.0
    %317 = vmatpush1.msra.mxu0 %v57
    %318 = vmatprep.subr.mxu0 0.0
    %319 = vmatpush1.msra.mxu0 %v58
    %320 = vmatprep.subr.mxu0 0.0
    %321 = vmatpush1.msra.mxu0 0.0
    %322 = vmatprep.subr.mxu0 0.0
    %323 = vmatpush1.msra.mxu0 0.0
    %324 = vmatprep.subr.mxu0 0.0
    %325 = vmatpush1.msra.mxu0 0.0
    %326 = vmatprep.subr.mxu0 0.0
    %327 = vmatpush1.msra.mxu0 0.0
    %328 = vmatprep.subr.mxu0 0.0
    %329 = vmatpush1.msra.mxu0 0.0
    %330 = vmatprep.subr.mxu0 0.0
    %331 = vmatpush1.msra.mxu0 0.0
    %332 = vmatprep.subr.mxu0 0.0
    %333 = vmatpush1.msra.mxu0 0.0
    %334 = vmatprep.subr.mxu0 0.0
    %335 = vmatpush1.msra.mxu0 0.0
    %336 = vmatprep.subr.mxu0 0.0
    %337 = vmatpush1.msra.mxu0 0.0
    %338 = vmatprep.subr.mxu0 0.0
    %339 = vmatpush1.msra.mxu0 0.0
    %340 = vmatprep.subr.mxu0 0.0
    %341 = vmatpush1.msra.mxu0 0.0
    %342 = vmatprep.subr.mxu0 0.0
    %343 = vmatpush1.msra.mxu0 0.0
    %344 = vmatprep.subr.mxu0 0.0
    %345 = vmatpush1.msra.mxu0 0.0
    %346 = vmatprep.subr.mxu0 0.0
    %347 = vmatpush1.msra.mxu0 0.0
    %348 = vmatprep.subr.mxu0 0.0
    %349 = vmatpush1.msra.mxu0 0.0
    %350 = vmatprep.subr.mxu0 0.0
    %351 = vmatpush1.msra.mxu0 0.0
    %352 = vmatprep.mubr.f32.mxu0 0.0
    %353 = vmatmul.mubr.f32.gmra.mrb[0].mxu0 %v283
    %v354 = vpop.f32.mrb[0].mxu0
    %v355 = vadd.f32 0.0, %v354
    %v356 = vpop.f32.mrb[0].mxu0
    %357 = vdwg.mxu0
    %v358 = vadd.f32 %v287, %v355
    %v359 = vtanh.pop %v358
    %s360 = scalar_lea.vmem [#allocation8], 24
    %361 = vst [vmem:[%s360] sm:$0xff] %v359
    %s362 = scalar_lea.vmem [#allocation5], 32
    %v363 = vld [vmem:[%s362] sm:$0xff]
    %364 = vmatprep.subr.mxu0 0.0
    %365 = vmatpush1.msra.mxu0 %v43
    %366 = vmatprep.subr.mxu0 0.0
    %367 = vmatpush1.msra.mxu0 %v44
    %368 = vmatprep.subr.mxu0 0.0
    %369 = vmatpush1.msra.mxu0 %v45
    %370 = vmatprep.subr.mxu0 0.0
    %371 = vmatpush1.msra.mxu0 %v46
    %372 = vmatprep.subr.mxu0 0.0
    %373 = vmatpush1.msra.mxu0 %v47
    %374 = vmatprep.subr.mxu0 0.0
    %375 = vmatpush1.msra.mxu0 %v48
    %376 = vmatprep.subr.mxu0 0.0
    %377 = vmatpush1.msra.mxu0 %v49
    %378 = vmatprep.subr.mxu0 0.0
    %379 = vmatpush1.msra.mxu0 %v50
    %380 = vmatprep.subr.mxu0 0.0
    %381 = vmatpush1.msra.mxu0 %v51
    %382 = vmatprep.subr.mxu0 0.0
    %383 = vmatpush1.msra.mxu0 %v52
    %384 = vmatprep.subr.mxu0 0.0
    %385 = vmatpush1.msra.mxu0 %v53
    %386 = vmatprep.subr.mxu0 0.0
    %387 = vmatpush1.msra.mxu0 %v54
    %388 = vmatprep.subr.mxu0 0.0
    %389 = vmatpush1.msra.mxu0 %v55
    %390 = vmatprep.subr.mxu0 0.0
    %391 = vmatpush1.msra.mxu0 %v56
    %392 = vmatprep.subr.mxu0 0.0
    %393 = vmatpush1.msra.mxu0 %v57
    %394 = vmatprep.subr.mxu0 0.0
    %395 = vmatpush1.msra.mxu0 %v58
    %396 = vmatprep.subr.mxu0 0.0
    %397 = vmatpush1.msra.mxu0 0.0
    %398 = vmatprep.subr.mxu0 0.0
    %399 = vmatpush1.msra.mxu0 0.0
    %400 = vmatprep.subr.mxu0 0.0
    %401 = vmatpush1.msra.mxu0 0.0
    %402 = vmatprep.subr.mxu0 0.0
    %403 = vmatpush1.msra.mxu0 0.0
    %404 = vmatprep.subr.mxu0 0.0
    %405 = vmatpush1.msra.mxu0 0.0
    %406 = vmatprep.subr.mxu0 0.0
    %407 = vmatpush1.msra.mxu0 0.0
    %408 = vmatprep.subr.mxu0 0.0
    %409 = vmatpush1.msra.mxu0 0.0
    %410 = vmatprep.subr.mxu0 0.0
    %411 = vmatpush1.msra.mxu0 0.0
    %412 = vmatprep.subr.mxu0 0.0
    %413 = vmatpush1.msra.mxu0 0.0
    %414 = vmatprep.subr.mxu0 0.0
    %415 = vmatpush1.msra.mxu0 0.0
    %416 = vmatprep.subr.mxu0 0.0
    %417 = vmatpush1.msra.mxu0 0.0
    %418 = vmatprep.subr.mxu0 0.0
    %419 = vmatpush1.msra.mxu0 0.0
    %420 = vmatprep.subr.mxu0 0.0
    %421 = vmatpush1.msra.mxu0 0.0
    %422 = vmatprep.subr.mxu0 0.0
    %423 = vmatpush1.msra.mxu0 0.0
    %424 = vmatprep.subr.mxu0 0.0
    %425 = vmatpush1.msra.mxu0 0.0
    %426 = vmatprep.subr.mxu0 0.0
    %427 = vmatpush1.msra.mxu0 0.0
    %428 = vmatprep.mubr.f32.mxu0 0.0
    %429 = vmatmul.mubr.f32.gmra.mrb[0].mxu0 %v359
    %v430 = vpop.f32.mrb[0].mxu0
    %v431 = vadd.f32 0.0, %v430
    %v432 = vpop.f32.mrb[0].mxu0
    %433 = vdwg.mxu0
    %v434 = vadd.f32 %v363, %v431
    %v435 = vtanh.pop %v434
    %s436 = scalar_lea.vmem [#allocation8], 32
    %437 = vst [vmem:[%s436] sm:$0xff] %v435
    %s438 = scalar_lea.vmem [#allocation5], 40
    %v439 = vld [vmem:[%s438] sm:$0xff]
    %440 = vmatprep.subr.mxu0 0.0
    %441 = vmatpush1.msra.mxu0 %v43
    %442 = vmatprep.subr.mxu0 0.0
    %443 = vmatpush1.msra.mxu0 %v44
    %444 = vmatprep.subr.mxu0 0.0
    %445 = vmatpush1.msra.mxu0 %v45
    %446 = vmatprep.subr.mxu0 0.0
    %447 = vmatpush1.msra.mxu0 %v46
    %448 = vmatprep.subr.mxu0 0.0
    %449 = vmatpush1.msra.mxu0 %v47
    %450 = vmatprep.subr.mxu0 0.0
    %451 = vmatpush1.msra.mxu0 %v48
    %452 = vmatprep.subr.mxu0 0.0
    %453 = vmatpush1.msra.mxu0 %v49
    %454 = vmatprep.subr.mxu0 0.0
    %455 = vmatpush1.msra.mxu0 %v50
    %456 = vmatprep.subr.mxu0 0.0
    %457 = vmatpush1.msra.mxu0 %v51
    %458 = vmatprep.subr.mxu0 0.0
    %459 = vmatpush1.msra.mxu0 %v52
    %460 = vmatprep.subr.mxu0 0.0
    %461 = vmatpush1.msra.mxu0 %v53
    %462 = vmatprep.subr.mxu0 0.0
    %463 = vmatpush1.msra.mxu0 %v54
    %464 = vmatprep.subr.mxu0 0.0
    %465 = vmatpush1.msra.mxu0 %v55
    %466 = vmatprep.subr.mxu0 0.0
    %467 = vmatpush1.msra.mxu0 %v56
    %468 = vmatprep.subr.mxu0 0.0
    %469 = vmatpush1.msra.mxu0 %v57
    %470 = vmatprep.subr.mxu0 0.0
    %471 = vmatpush1.msra.mxu0 %v58
    %472 = vmatprep.subr.mxu0 0.0
    %473 = vmatpush1.msra.mxu0 0.0
    %474 = vmatprep.subr.mxu0 0.0
    %475 = vmatpush1.msra.mxu0 0.0
    %476 = vmatprep.subr.mxu0 0.0
    %477 = vmatpush1.msra.mxu0 0.0
    %478 = vmatprep.subr.mxu0 0.0
    %479 = vmatpush1.msra.mxu0 0.0
    %480 = vmatprep.subr.mxu0 0.0
    %481 = vmatpush1.msra.mxu0 0.0
    %482 = vmatprep.subr.mxu0 0.0
    %483 = vmatpush1.msra.mxu0 0.0
    %484 = vmatprep.subr.mxu0 0.0
    %485 = vmatpush1.msra.mxu0 0.0
    %486 = vmatprep.subr.mxu0 0.0
    %487 = vmatpush1.msra.mxu0 0.0
    %488 = vmatprep.subr.mxu0 0.0
    %489 = vmatpush1.msra.mxu0 0.0
    %490 = vmatprep.subr.mxu0 0.0
    %491 = vmatpush1.msra.mxu0 0.0
    %492 = vmatprep.subr.mxu0 0.0
    %493 = vmatpush1.msra.mxu0 0.0
    %494 = vmatprep.subr.mxu0 0.0
    %495 = vmatpush1.msra.mxu0 0.0
    %496 = vmatprep.subr.mxu0 0.0
    %497 = vmatpush1.msra.mxu0 0.0
    %498 = vmatprep.subr.mxu0 0.0
    %499 = vmatpush1.msra.mxu0 0.0
    %500 = vmatprep.subr.mxu0 0.0
    %501 = vmatpush1.msra.mxu0 0.0
    %502 = vmatprep.subr.mxu0 0.0
    %503 = vmatpush1.msra.mxu0 0.0
    %504 = vmatprep.mubr.f32.mxu0 0.0
    %505 = vmatmul.mubr.f32.gmra.mrb[0].mxu0 %v435
    %v506 = vpop.f32.mrb[0].mxu0
    %v507 = vadd.f32 0.0, %v506
    %v508 = vpop.f32.mrb[0].mxu0
    %509 = vdwg.mxu0
    %v510 = vadd.f32 %v439, %v507
    %v511 = vtanh.pop %v510
    %s512 = scalar_lea.vmem [#allocation8], 40
    %513 = vst [vmem:[%s512] sm:$0xff] %v511
    %s514 = scalar_lea.vmem [#allocation5], 48
    %v515 = vld [vmem:[%s514] sm:$0xff]
    %516 = vmatprep.subr.mxu0 0.0
    %517 = vmatpush1.msra.mxu0 %v43
    %518 = vmatprep.subr.mxu0 0.0
    %519 = vmatpush1.msra.mxu0 %v44
    %520 = vmatprep.subr.mxu0 0.0
    %521 = vmatpush1.msra.mxu0 %v45
    %522 = vmatprep.subr.mxu0 0.0
    %523 = vmatpush1.msra.mxu0 %v46
    %524 = vmatprep.subr.mxu0 0.0
    %525 = vmatpush1.msra.mxu0 %v47
    %526 = vmatprep.subr.mxu0 0.0
    %527 = vmatpush1.msra.mxu0 %v48
    %528 = vmatprep.subr.mxu0 0.0
    %529 = vmatpush1.msra.mxu0 %v49
    %530 = vmatprep.subr.mxu0 0.0
    %531 = vmatpush1.msra.mxu0 %v50
    %532 = vmatprep.subr.mxu0 0.0
    %533 = vmatpush1.msra.mxu0 %v51
    %534 = vmatprep.subr.mxu0 0.0
    %535 = vmatpush1.msra.mxu0 %v52
    %536 = vmatprep.subr.mxu0 0.0
    %537 = vmatpush1.msra.mxu0 %v53
    %538 = vmatprep.subr.mxu0 0.0
    %539 = vmatpush1.msra.mxu0 %v54
    %540 = vmatprep.subr.mxu0 0.0
    %541 = vmatpush1.msra.mxu0 %v55
    %542 = vmatprep.subr.mxu0 0.0
    %543 = vmatpush1.msra.mxu0 %v56
    %544 = vmatprep.subr.mxu0 0.0
    %545 = vmatpush1.msra.mxu0 %v57
    %546 = vmatprep.subr.mxu0 0.0
    %547 = vmatpush1.msra.mxu0 %v58
    %548 = vmatprep.subr.mxu0 0.0
    %549 = vmatpush1.msra.mxu0 0.0
    %550 = vmatprep.subr.mxu0 0.0
    %551 = vmatpush1.msra.mxu0 0.0
    %552 = vmatprep.subr.mxu0 0.0
    %553 = vmatpush1.msra.mxu0 0.0
    %554 = vmatprep.subr.mxu0 0.0
    %555 = vmatpush1.msra.mxu0 0.0
    %556 = vmatprep.subr.mxu0 0.0
    %557 = vmatpush1.msra.mxu0 0.0
    %558 = vmatprep.subr.mxu0 0.0
    %559 = vmatpush1.msra.mxu0 0.0
    %560 = vmatprep.subr.mxu0 0.0
    %561 = vmatpush1.msra.mxu0 0.0
    %562 = vmatprep.subr.mxu0 0.0
    %563 = vmatpush1.msra.mxu0 0.0
    %564 = vmatprep.subr.mxu0 0.0
    %565 = vmatpush1.msra.mxu0 0.0
    %566 = vmatprep.subr.mxu0 0.0
    %567 = vmatpush1.msra.mxu0 0.0
    %568 = vmatprep.subr.mxu0 0.0
    %569 = vmatpush1.msra.mxu0 0.0
    %570 = vmatprep.subr.mxu0 0.0
    %571 = vmatpush1.msra.mxu0 0.0
    %572 = vmatprep.subr.mxu0 0.0
    %573 = vmatpush1.msra.mxu0 0.0
    %574 = vmatprep.subr.mxu0 0.0
    %575 = vmatpush1.msra.mxu0 0.0
    %576 = vmatprep.subr.mxu0 0.0
    %577 = vmatpush1.msra.mxu0 0.0
    %578 = vmatprep.subr.mxu0 0.0
    %579 = vmatpush1.msra.mxu0 0.0
    %580 = vmatprep.mubr.f32.mxu0 0.0
    %581 = vmatmul.mubr.f32.gmra.mrb[0].mxu0 %v511
    %v582 = vpop.f32.mrb[0].mxu0
    %v583 = vadd.f32 0.0, %v582
    %v584 = vpop.f32.mrb[0].mxu0
    %585 = vdwg.mxu0
    %v586 = vadd.f32 %v515, %v583
    %v587 = vtanh.pop %v586
    %s588 = scalar_lea.vmem [#allocation8], 48
    %589 = vst [vmem:[%s588] sm:$0xff] %v587
    %s590 = scalar_lea.vmem [#allocation5], 56
    %v591 = vld [vmem:[%s590] sm:$0xff]
    %592 = vmatprep.subr.mxu0 0.0
    %593 = vmatpush1.msra.mxu0 %v43
    %594 = vmatprep.subr.mxu0 0.0
    %595 = vmatpush1.msra.mxu0 %v44
    %596 = vmatprep.subr.mxu0 0.0
    %597 = vmatpush1.msra.mxu0 %v45
    %598 = vmatprep.subr.mxu0 0.0
    %599 = vmatpush1.msra.mxu0 %v46
    %600 = vmatprep.subr.mxu0 0.0
    %601 = vmatpush1.msra.mxu0 %v47
    %602 = vmatprep.subr.mxu0 0.0
    %603 = vmatpush1.msra.mxu0 %v48
    %604 = vmatprep.subr.mxu0 0.0
    %605 = vmatpush1.msra.mxu0 %v49
    %606 = vmatprep.subr.mxu0 0.0
    %607 = vmatpush1.msra.mxu0 %v50
    %608 = vmatprep.subr.mxu0 0.0
    %609 = vmatpush1.msra.mxu0 %v51
    %610 = vmatprep.subr.mxu0 0.0
    %611 = vmatpush1.msra.mxu0 %v52
    %612 = vmatprep.subr.mxu0 0.0
    %613 = vmatpush1.msra.mxu0 %v53
    %614 = vmatprep.subr.mxu0 0.0
    %615 = vmatpush1.msra.mxu0 %v54
    %616 = vmatprep.subr.mxu0 0.0
    %617 = vmatpush1.msra.mxu0 %v55
    %618 = vmatprep.subr.mxu0 0.0
    %619 = vmatpush1.msra.mxu0 %v56
    %620 = vmatprep.subr.mxu0 0.0
    %621 = vmatpush1.msra.mxu0 %v57
    %622 = vmatprep.subr.mxu0 0.0
    %623 = vmatpush1.msra.mxu0 %v58
    %624 = vmatprep.subr.mxu0 0.0
    %625 = vmatpush1.msra.mxu0 0.0
    %626 = vmatprep.subr.mxu0 0.0
    %627 = vmatpush1.msra.mxu0 0.0
    %628 = vmatprep.subr.mxu0 0.0
    %629 = vmatpush1.msra.mxu0 0.0
    %630 = vmatprep.subr.mxu0 0.0
    %631 = vmatpush1.msra.mxu0 0.0
    %632 = vmatprep.subr.mxu0 0.0
    %633 = vmatpush1.msra.mxu0 0.0
    %634 = vmatprep.subr.mxu0 0.0
    %635 = vmatpush1.msra.mxu0 0.0
    %636 = vmatprep.subr.mxu0 0.0
    %637 = vmatpush1.msra.mxu0 0.0
    %638 = vmatprep.subr.mxu0 0.0
    %639 = vmatpush1.msra.mxu0 0.0
    %640 = vmatprep.subr.mxu0 0.0
    %641 = vmatpush1.msra.mxu0 0.0
    %642 = vmatprep.subr.mxu0 0.0
    %643 = vmatpush1.msra.mxu0 0.0
    %644 = vmatprep.subr.mxu0 0.0
    %645 = vmatpush1.msra.mxu0 0.0
    %646 = vmatprep.subr.mxu0 0.0
    %647 = vmatpush1.msra.mxu0 0.0
    %648 = vmatprep.subr.mxu0 0.0
    %649 = vmatpush1.msra.mxu0 0.0
    %650 = vmatprep.subr.mxu0 0.0
    %651 = vmatpush1.msra.mxu0 0.0
    %652 = vmatprep.subr.mxu0 0.0
    %653 = vmatpush1.msra.mxu0 0.0
    %654 = vmatprep.subr.mxu0 0.0
    %655 = vmatpush1.msra.mxu0 0.0
    %656 = vmatprep.mubr.f32.mxu0 0.0
    %657 = vmatmul.mubr.f32.gmra.mrb[0].mxu0 %v587
    %v658 = vpop.f32.mrb[0].mxu0
    %v659 = vadd.f32 0.0, %v658
    %v660 = vpop.f32.mrb[0].mxu0
    %661 = vdwg.mxu0
    %v662 = vadd.f32 %v591, %v659
    %v663 = vtanh.pop %v662
    %s664 = scalar_lea.vmem [#allocation8], 56
    %665 = vst [vmem:[%s664] sm:$0xff] %v663
    %666 = vst [vmem:[#allocation2] sm:$0xff] %v663
    // Predicated region
    $region18: #{tpu_custom_call.1} parent=1 // pred_check
      _
    $region19: #{tpu_custom_call.1} parent=1 // pred_check_branch
      %668 = sbr.rel (0) target = $region21
    $region20: #{tpu_custom_call.1} parent=1 // pred_region
      %s670 = ssub.s32 1024, 1024
      %671 = vsyncadd [#allocation7], %s670
      %s672 = sshll.u32 [#allocation8], 4
      %s673 = int_to_ptr.vmem [resolvable:$true] %s672
      %678 = dma.vmem_to_hbm [thread:$0]  %s673, 1024, %s2, [#allocation7], 128, 128, 8
    $region21: #{tpu_custom_call.1} parent=1 // pred_fallthru
      _
    // Predicated region
    $region22: #{tpu_custom_call.1} parent=1 // pred_check
      _
    $region23: #{tpu_custom_call.1} parent=1 // pred_check_branch
      %680 = sbr.rel (0) target = $region25
    $region24: #{tpu_custom_call.1} parent=1 // pred_region
      %681 = dma.done [#allocation7], 1024
    $region25: #{tpu_custom_call.1} parent=1 // pred_fallthru
      _
    %682 = vsyncpa [#allocation6], 1
    %683 = vsyncpa [#allocation7], 1
  %684 = vsyncmov [#allocation4]
  %s685 = vpop.sfrf %684
  %p686 = scmp.eq.s32.totalorder %s685, 0
  %p687 = pneg %p686
  %689 = shalt.err (%p687)

</llo_original>
